<compile_context>
chip_gen: v7x
topology: tpu7x:2x2x1
jax: 0.10.0
libtpu: 0.0.40
codegen_flags: <defaults>
</compile_context>

<pallas_src>
import functools

import jax
import jax.numpy as jnp
from jax import lax
from jax.experimental import pallas as pl
from jax.experimental.pallas import tpu as pltpu

N_EMBD = 384                       # matches the PyTorch module's hardcoded n_embd
NEG_INF = -1e30
_VMEM_LIMIT = 32 * 1024 * 1024     # safe explicit scoped-VMEM budget on v5e/v6e/v7x


# ---------------------------------------------------------------------------
# Parameter prep (hoisted out of the forward pass — do this once)
# ---------------------------------------------------------------------------
def make_fused_qkv_weight(w_key, w_query, w_value, mxu_dtype=jnp.bfloat16):
    """Fuse PyTorch-style (H, C) weights into one (C, 3H) slab: [q | k | v].

    The softmax scale (C**-0.5, matching the quoted PyTorch code which uses C,
    not head_size) is folded into the query columns so the kernel never scales
    the (bq, bkv) score tile.
    """
    C = w_key.shape[1]
    scale = float(C) ** -0.5
    w = jnp.concatenate(
        [w_query.T.astype(jnp.float32) * scale,
         w_key.T.astype(jnp.float32),
         w_value.T.astype(jnp.float32)], axis=1)
    return w.astype(mxu_dtype)


# ---------------------------------------------------------------------------
# Kernel 1: fused Q/K/V projection   x(B,T,C) @ w(C,3H) -> qkv(B,T,3H)
# ---------------------------------------------------------------------------
def qkv_proj_kernel(x_ref, w_ref, qkv_ref):
    # One MXU matmul, one lane-dense (bp, 3H) store.
    qkv_ref[0] = jnp.dot(
        x_ref[0], w_ref[...],
        preferred_element_type=jnp.float32).astype(qkv_ref.dtype)


# ---------------------------------------------------------------------------
# Kernel 2: causal flash attention over a lower-triangular (qi, ki) pair table
# ---------------------------------------------------------------------------
def flash_attn_kernel(qi_ids_ref, ki_ids_ref, q_ref, kv_ref, o_ref,
                      m_sc, l_sc, acc_sc, *,
                      block_q, block_kv, head_size, softmax_dtype):
    p = pl.program_id(1)
    qi = qi_ids_ref[p]
    ki = ki_ids_ref[p]
    H = head_size

    @pl.when(ki == 0)
    def _init():
        m_sc[...] = jnp.full(m_sc.shape, NEG_INF, dtype=m_sc.dtype)
        l_sc[...] = jnp.zeros(l_sc.shape, dtype=l_sc.dtype)
        acc_sc[...] = jnp.zeros(acc_sc.shape, dtype=acc_sc.dtype)

    q_start = qi * block_q
    kv_start = ki * block_kv
    last_needed = (q_start + block_q - 1) // block_kv   # last kv tile for this qi

    # slice the fused slab; q already carries the C**-0.5 scale
    q = q_ref[0, :, 0:H]            # (bq, H)  bf16
    k = kv_ref[0, :, H:2 * H]       # (bk, H)  bf16
    v = kv_ref[0, :, 2 * H:3 * H]   # (bk, H)  bf16

    # contract on the last dim of both operands -> no explicit k.T relayout
    s = lax.dot_general(q, k,
                        dimension_numbers=(((1,), (1,)), ((), ())),
                        preferred_element_type=jnp.float32)     # (bq, bk) f32

    def online_update(s):
        m_prev = m_sc[...]
        m_new = jnp.maximum(m_prev, jnp.max(s, axis=-1, keepdims=True))
        alpha = jnp.exp((m_prev - m_new).astype(softmax_dtype)).astype(jnp.float32)
        probs = jnp.exp((s - m_new).astype(softmax_dtype))
        l_sc[...] = alpha * l_sc[...] + jnp.sum(
            probs, axis=-1, keepdims=True, dtype=jnp.float32)
        acc_sc[...] = alpha * acc_sc[...] + jnp.dot(
            probs.astype(v.dtype), v, preferred_element_type=jnp.float32)
        m_sc[...] = m_new

    # Pair table only contains tiles with work; classify unmasked vs diagonal.
    fully_unmasked = kv_start + (block_kv - 1) <= q_start

    @pl.when(fully_unmasked)                 # strictly below the diagonal
    def _no_mask():
        online_update(s)

    @pl.when(jnp.logical_not(fully_unmasked))  # diagonal-straddling tiles only
    def _masked():
        row = q_start + lax.broadcasted_iota(jnp.int32, (block_q, block_kv), 0)
        col = kv_start + lax.broadcasted_iota(jnp.int32, (block_q, block_kv), 1)
        online_update(jnp.where(col <= row, s, NEG_INF))

    @pl.when(ki == last_needed)
    def _finalize():
        # exact reciprocal: runs once per q tile, accuracy over approx-EUP win
        o_ref[0] = (acc_sc[...] / l_sc[...]).astype(o_ref.dtype)


# ---------------------------------------------------------------------------
# Wrapper helpers
# ---------------------------------------------------------------------------
def _pick_block(dim, preferred):
    """Largest divisor of `dim` that is <= preferred (never falls back to dim
    unless dim itself is the only divisor <= preferred)."""
    preferred = max(1, min(int(preferred), int(dim)))
    for b in range(preferred, 0, -1):
        if dim % b == 0:
            return b
    return dim


def _default_attn_blocks():
    """Chip-aware default (block_q, block_kv)."""
    try:
        kind = jax.devices()[0].device_kind.lower()
    except Exception:
        kind = ""
    if "v5 lite" in kind or "v5lite" in kind or "v5e" in kind:
        return 256, 128        # 128-wide MXU; keep f32 score tile / vregs small
    return 512, 256            # v6e / v7x: 256-wide MXU, fewer K/V re-streams


def _causal_pair_table(nq, nk, block_q, block_kv):
    """Lower-triangular (qi, ki) tile pairs — fully masked tiles never appear."""
    qi_ids, ki_ids = [], []
    for qi in range(nq):
        last = min((qi * block_q + block_q - 1) // block_kv, nk - 1)
        for ki in range(last + 1):
            qi_ids.append(qi)
            ki_ids.append(ki)
    return (jnp.asarray(qi_ids, dtype=jnp.int32),
            jnp.asarray(ki_ids, dtype=jnp.int32))


# ---------------------------------------------------------------------------
# Forward pass
# ---------------------------------------------------------------------------
def head_forward(x, w_qkv, *, block_q=None, block_kv=None, block_proj=512,
                 softmax_dtype=jnp.float32, out_dtype=None):
    """x: (B, T, C).  w_qkv: fused (C, 3H) weight from make_fused_qkv_weight."""
    B, T, C = x.shape
    H3 = w_qkv.shape[1]
    H = H3 // 3
    mxu_dtype = w_qkv.dtype
    out_dtype = x.dtype if out_dtype is None else out_dtype

    if block_q is None or block_kv is None:
        dq, dk = _default_attn_blocks()
        block_q = dq if block_q is None else block_q
        block_kv = dk if block_kv is None else block_kv

    bp = _pick_block(T, block_proj)
    bq = _pick_block(T, block_q)
    bk = _pick_block(T, block_kv)
    nq, nk = T // bq, T // bk

    isz = jnp.dtype(mxu_dtype).itemsize
    osz = jnp.dtype(out_dtype).itemsize

    x_mxu = x if x.dtype == mxu_dtype else x.astype(mxu_dtype)

    # ---- fused Q/K/V projection (memory-bound; large lane-dense tiles) -----
    proj_cost = pl.CostEstimate(
        flops=int(2 * B * T * C * H3),
        transcendentals=0,
        bytes_accessed=int(isz * (B * T * C + C * H3 + B * T * H3)))

    qkv = pl.pallas_call(
        qkv_proj_kernel,
        out_shape=jax.ShapeDtypeStruct((B, T, H3), mxu_dtype),
        grid_spec=pltpu.PrefetchScalarGridSpec(
            num_scalar_prefetch=0,
            grid=(B, T // bp),
            in_specs=[
                pl.BlockSpec((1, bp, C), lambda b, t: (b, t, 0)),
                pl.BlockSpec((C, H3), lambda b, t: (0, 0)),
            ],
            out_specs=pl.BlockSpec((1, bp, H3), lambda b, t: (b, t, 0)),
        ),
        compiler_params=pltpu.CompilerParams(
            dimension_semantics=("parallel", "parallel"),
            vmem_limit_bytes=_VMEM_LIMIT),
        cost_estimate=proj_cost,
    )(x_mxu, w_qkv)

    # ---- causal flash attention over the (qi, ki) pair table ---------------
    qi_ids, ki_ids = _causal_pair_table(nq, nk, bq, bk)
    n_pairs = int(qi_ids.shape[0])

    attn_cost = pl.CostEstimate(
        flops=int(4 * B * n_pairs * bq * bk * H),
        transcendentals=int(B * n_pairs * bq * bk),
        bytes_accessed=int(isz * (B * n_pairs * bk * H3 + B * T * H3)
                           + osz * B * T * H))

    kernel = functools.partial(flash_attn_kernel,
                               block_q=bq, block_kv=bk, head_size=H,
                               softmax_dtype=softmax_dtype)

    return pl.pallas_call(
        kernel,
        out_shape=jax.ShapeDtypeStruct((B, T, H), out_dtype),
        grid_spec=pltpu.PrefetchScalarGridSpec(
            num_scalar_prefetch=2,                 # qi_ids, ki_ids -> SMEM
            grid=(B, n_pairs),
            in_specs=[
                # q rows of the fused slab (re-fetched only when qi changes)
                pl.BlockSpec((1, bq, H3), lambda b, p, qi, ki: (b, qi[p], 0)),
                # kv rows of the fused slab
                pl.BlockSpec((1, bk, H3), lambda b, p, qi, ki: (b, ki[p], 0)),
            ],
            out_specs=pl.BlockSpec((1, bq, H), lambda b, p, qi, ki: (b, qi[p], 0)),
            scratch_shapes=[
                pltpu.VMEM((bq, 1), jnp.float32),   # running max
                pltpu.VMEM((bq, 1), jnp.float32),   # running sum
                pltpu.VMEM((bq, H), jnp.float32),   # output accumulator
            ],
        ),
        compiler_params=pltpu.CompilerParams(
            dimension_semantics=("parallel", "arbitrary"),
            vmem_limit_bytes=_VMEM_LIMIT),
        cost_estimate=attn_cost,
    )(qi_ids, ki_ids, qkv, qkv)


# ---------------------------------------------------------------------------
# Pure-JAX reference (mirrors the PyTorch forward, eval mode)
# ---------------------------------------------------------------------------
def head_reference(x, w_key, w_query, w_value):
    B, T, C = x.shape
    k = x @ w_key.T
    q = x @ w_query.T
    v = x @ w_value.T
    wei = jnp.einsum("bth,bsh->bts", q, k) * (C ** -0.5)
    row = jnp.arange(T)[:, None]
    col = jnp.arange(T)[None, :]
    wei = jnp.where(col <= row, wei, -jnp.inf)
    wei = jax.nn.softmax(wei, axis=-1)
    return jnp.einsum("bts,bsh->bth", wei, v)


if __name__ == "__main__":
    B, T, HEAD_SIZE = 2, 32, 64            # small shapes; 8/16-row tiles exercise
    key = jax.random.PRNGKey(0)            # multi-tile online softmax + pair table
    kx, kk, kq, kv = jax.random.split(key, 4)

    x = jax.random.normal(kx, (B, T, N_EMBD), dtype=jnp.float32)
    # deterministic "Linear(n_embd, head_size, bias=False)" weights: (head_size, n_embd)
    s = 1.0 / (N_EMBD ** 0.5)
    w_key = jax.random.uniform(kk, (HEAD_SIZE, N_EMBD), jnp.float32, -s, s)
    w_query = jax.random.uniform(kq, (HEAD_SIZE, N_EMBD), jnp.float32, -s, s)
    w_value = jax.random.uniform(kv, (HEAD_SIZE, N_EMBD), jnp.float32, -s, s)

    # fused weight is prepared once, outside the forward pass
    w_qkv = make_fused_qkv_weight(w_key, w_query, w_value)      # (384, 192) bf16

    out = head_forward(x, w_qkv, block_q=16, block_kv=8, block_proj=16)
    out = jax.block_until_ready(out)

    ref = head_reference(x, w_key, w_query, w_value)
    assert out.shape == (B, T, HEAD_SIZE)
    max_err = float(jnp.max(jnp.abs(out - ref)))
    # bf16 MXU operands (f32 accumulation) -> a few-milli absolute error budget
    assert jnp.allclose(out, ref, atol=3e-2, rtol=3e-2), f"max abs err {max_err}"

    print("KERNEL_OK")
</pallas_src>

<mosaic_0001>
module attributes {stable_mosaic.version = 11 : i64} {
  func.func @qkv_proj_kernel(%arg0: i32, %arg1: i32, %arg2: memref<1x16x384xbf16, #tpu.memory_space<vmem>>, %arg3: memref<384x192xbf16, #tpu.memory_space<vmem>>, %arg4: memref<1x16x192xbf16, #tpu.memory_space<vmem>>) attributes {dimension_semantics = [#tpu.dimension_semantics<parallel>, #tpu.dimension_semantics<parallel>], iteration_bounds = array<i64: 2, 2>, scalar_prefetch = 0 : i64, scratch_operands = 0 : i64, tpu.core_type = #tpu.core_type<tc>, window_params = [{transform_indices = @transform_0, window_bounds = array<i64: 1, 16, 384>}, {pipeline_mode = #tpu.pipeline_mode<synchronous>, transform_indices = @transform_1, window_bounds = array<i64: 384, 192>}, {transform_indices = @transform_2, window_bounds = array<i64: 1, 16, 192>}]} {
    %c0 = arith.constant 0 : index
    %c0_0 = arith.constant 0 : index
    %c0_1 = arith.constant 0 : index
    %0 = vector.load %arg2[%c0, %c0_0, %c0_1] : memref<1x16x384xbf16, #tpu.memory_space<vmem>>, vector<1x16x384xbf16>
    %1 = vector.shape_cast %0 : vector<1x16x384xbf16> to vector<16x384xbf16>
    %c0_2 = arith.constant 0 : index
    %c0_3 = arith.constant 0 : index
    %2 = vector.load %arg3[%c0_2, %c0_3] : memref<384x192xbf16, #tpu.memory_space<vmem>>, vector<384x192xbf16>
    %cst = arith.constant dense<0.000000e+00> : vector<16x192xf32>
    %3 = tpu.matmul %1, %2, %cst {dimension_numbers = #tpu.dot_dimension_numbers<[1], [0], [0], [1], [0, 0, 1, 1], [], []>} : vector<16x384xbf16>, vector<384x192xbf16>, vector<16x192xf32> -> vector<16x192xf32>
    %4 = arith.truncf %3 : vector<16x192xf32> to vector<16x192xbf16>
    %c0_4 = arith.constant 0 : index
    %c0_5 = arith.constant 0 : index
    %c0_6 = arith.constant 0 : index
    %5 = vector.load %arg4[%c0_4, %c0_5, %c0_6] : memref<1x16x192xbf16, #tpu.memory_space<vmem>>, vector<1x16x192xbf16>
    %6 = vector.shape_cast %5 : vector<1x16x192xbf16> to vector<16x192xbf16>
    %7 = vector.shape_cast %4 : vector<16x192xbf16> to vector<1x16x192xbf16>
    tpu.vector_store %arg4[%c0_4, %c0_5, %c0_6], %7 {strides = array<i32>} : memref<1x16x192xbf16, #tpu.memory_space<vmem>>, vector<1x16x192xbf16>,
    return
  }
  func.func @transform_0(%arg0: i32, %arg1: i32) -> (i32, i32, i32) {
    %c0_i32 = arith.constant 0 : i32
    %c0_i32_0 = arith.constant 0 : i32
    return %arg0, %arg1, %c0_i32 : i32, i32, i32
  }
  func.func @transform_1(%arg0: i32, %arg1: i32) -> (i32, i32) {
    %c0_i32 = arith.constant 0 : i32
    %c0_i32_0 = arith.constant 0 : i32
    %c0_i32_1 = arith.constant 0 : i32
    return %c0_i32, %c0_i32_0 : i32, i32
  }
  func.func @transform_2(%arg0: i32, %arg1: i32) -> (i32, i32, i32) {
    %c0_i32 = arith.constant 0 : i32
    %c0_i32_0 = arith.constant 0 : i32
    return %arg0, %arg1, %c0_i32 : i32, i32, i32
  }
}

</mosaic_0001>

<llo_original>
// kernel: tpu_custom_call.1
$region0: #{tpu_custom_call.1}
  #allocation0 [shape = 'u32[]', space=smem, size = 0x4, offset = 0x4, fixed_abs, tag = 'smem constant byte address 0x4 - core index']
  #allocation1 [shape = 'u32[144,128]{1,0:T(1,128)}', space=vmem, size = 0x12000, scoped, tag = 'internal scratch']
  %s0 = inlined_call_operand.vmem [shape: bf16[2,32,384], index: 0, kind: input, shape index: {}]
  %s1 = inlined_call_operand.vmem [shape: bf16[384,192], index: 1, kind: input, shape index: {}]
  %s2 = inlined_call_operand.hbm [shape: bf16[2,32,192], index: 2, kind: output, shape index: {}]
  %s3 = sld [smem:[#allocation0]]
  $region41: #{tpu_custom_call.1} parent=0
    _
  %s5 = ssub.s32 1, %s3
  %s6 = scalar_select 0, %s5, %s3
  $region1: #{tpu_custom_call.1} parent=0
    #allocation2 [shape = 'u8[16384]{0}', space=vmem, size = 0x4000, scoped, tag = 'output window, operand 0']
    #allocation3 [shape = 's32[2]{0}', space=sflag, size = 0x8, scoped, tag = 'scoped memory for tpu_custom_call.1']
    %7 = vsyncpa [#allocation3], 0
    %s8 = scalar_lea.sflag [#allocation3], 1
    %9 = vsyncpa %s8, 0
    loop: start=0, step=1, limit=6
    $region2: #{tpu_custom_call.1} parent=1 // loop_pre_header
      _
    $region3: #{tpu_custom_call.1} parent=1 // loop_header
      %s11 = sphi 0, %s15
      %p12 = scmp.ge.s32.totalorder %s11, 6
      %s18 = sphi 0, %s30
      %s19 = sphi 0, %s26
      %s20 = sphi 0, %s18
      %s21 = sphi 0, %s19
      %s22 = sphi 0, %s20
      %s23 = sphi 0, %s21
      %s35 = sphi 0, %s37
      %s38 = sphi 0, %s35
      %s39 = sphi 0, %s38
      %s55 = sphi 0, %s39
      %s59 = sphi 0, %s59
      %s61 = sphi 0, %s59
      %s62 = sphi 0, %s61
      %s76 = sphi 0, %s62
      %s84 = sphi 0, %s86
      %s87 = sphi 0, %s84
      %s88 = sphi 0, %s87
      %s104 = sphi 0, %s88
    $region4: #{tpu_custom_call.1} parent=1 // loop_header_branch
      %14 = sbr.rel (%p12) target = $region8
    $region5: #{tpu_custom_call.1} parent=1 // loop_body
      %s16 = ssub.s32 %s11, 1
      %s17 = ssub.s32 %s11, 2
      %s24 = sadd.s32 1, %s19
      %p25 = scmp.ge.s32.totalorder %s24, 2
      %s26 = scalar_select %p25, 0, %s24
      %s27 = sadd.s32 1, %s18
      %s28 = scalar_select %p25, %s27, %s18
      %p29 = scmp.ge.s32.totalorder %s28, 2
      %s30 = scalar_select %p29, 0, %s28
      %s31 = ssub.s32 %s18, %s30
      %s32 = ssub.s32 %s19, %s26
      %s33 = sor.u32 %s31, %s32
      %p34 = scmp.eq.s32.totalorder %s33, 0
      %s36 = sadd.s32 %s35, 1
      %s37 = scalar_select %p34, %s35, %s36
      %p40 = pneg %p34
      %p41 = scmp.eq.s32.totalorder %s11, 3
      %p42 = por %p40, %p41
      %p43 = scmp.ne.s32.totalorder %s35, %s38
      %p44 = scmp.eq.s32.totalorder %s11, 0
      %p45 = por %p43, %p44
      %p46 = scmp.ne.s32.totalorder %s35, %s38
      %p47 = scmp.eq.s32.totalorder %s16, 3
      %p48 = por %p46, %p47
      %p49 = scmp.ne.s32.totalorder %s38, %s39
      %p50 = scmp.eq.s32.totalorder %s16, 0
      %p51 = por %p49, %p50
      %p52 = scmp.ne.s32.totalorder %s38, %s39
      %p53 = scmp.eq.s32.totalorder %s17, 3
      %p54 = por %p52, %p53
      %p56 = scmp.ne.s32.totalorder %s39, %s55
      %p57 = scmp.eq.s32.totalorder %s17, 0
      %p58 = por %p56, %p57
      %s60 = sadd.s32 %s59, 1
      %p63 = scmp.eq.s32.totalorder %s11, 3
      %p64 = scmp.ne.s32.totalorder %s59, %s61
      %p65 = scmp.eq.s32.totalorder %s11, 0
      %p66 = por %p64, %p65
      %p67 = scmp.ne.s32.totalorder %s59, %s61
      %p68 = scmp.eq.s32.totalorder %s16, 3
      %p69 = por %p67, %p68
      %p70 = scmp.ne.s32.totalorder %s61, %s62
      %p71 = scmp.eq.s32.totalorder %s16, 0
      %p72 = por %p70, %p71
      %p73 = scmp.ne.s32.totalorder %s61, %s62
      %p74 = scmp.eq.s32.totalorder %s17, 3
      %p75 = por %p73, %p74
      %p77 = scmp.ne.s32.totalorder %s62, %s76
      %p78 = scmp.eq.s32.totalorder %s17, 0
      %p79 = por %p77, %p78
      %s80 = ssub.s32 %s18, %s30
      %s81 = ssub.s32 %s19, %s26
      %s82 = sor.u32 %s80, %s81
      %p83 = scmp.eq.s32.totalorder %s82, 0
      %s85 = sadd.s32 %s84, 1
      %s86 = scalar_select %p83, %s84, %s85
      %p89 = pneg %p83
      %p90 = scmp.eq.s32.totalorder %s11, 3
      %p91 = por %p89, %p90
      %p92 = scmp.ne.s32.totalorder %s84, %s87
      %p93 = scmp.eq.s32.totalorder %s11, 0
      %p94 = por %p92, %p93
      %p95 = scmp.ne.s32.totalorder %s84, %s87
      %p96 = scmp.eq.s32.totalorder %s16, 3
      %p97 = por %p95, %p96
      %p98 = scmp.ne.s32.totalorder %s87, %s88
      %p99 = scmp.eq.s32.totalorder %s16, 0
      %p100 = por %p98, %p99
      %p101 = scmp.ne.s32.totalorder %s87, %s88
      %p102 = scmp.eq.s32.totalorder %s17, 3
      %p103 = por %p101, %p102
      %p105 = scmp.ne.s32.totalorder %s88, %s104
      %p106 = scmp.eq.s32.totalorder %s17, 0
      %p107 = por %p105, %p106
      %p108 = scmp.le.s32.totalorder 1, %s11
      %p109 = scmp.lt.s32.totalorder %s11, 5
      %p110 = pnand %p108, %p109
      %p111 = pneg %p110
      // Predicated region
      $region9: #{tpu_custom_call.1} parent=5 // pred_check
        _
      $region10: #{tpu_custom_call.1} parent=5 // pred_check_branch
        %113 = sbr.rel (%p110) target = $region12
      $region11: #{tpu_custom_call.1} parent=5 // pred_region
        %s114 = ssub.s32 %s11, 1
        // Predicated region
        $region13: #{tpu_custom_call.1} parent=11 // pred_check
          %p115 = pneg %p72
        $region14: #{tpu_custom_call.1} parent=11 // pred_check_branch
          %117 = sbr.rel (%p115) target = $region16
        $region15: #{tpu_custom_call.1} parent=11 // pred_region
          _
        $region16: #{tpu_custom_call.1} parent=11 // pred_fallthru
          _
      $region12: #{tpu_custom_call.1} parent=5 // pred_fallthru
        _
      %p118 = scmp.lt.s32.totalorder %s11, 4
      // Predicated region
      $region17: #{tpu_custom_call.1} parent=5 // pred_check
        %p119 = pneg %p118
      $region18: #{tpu_custom_call.1} parent=5 // pred_check_branch
        %121 = sbr.rel (%p119) target = $region20
      $region19: #{tpu_custom_call.1} parent=5 // pred_region
        // Predicated region
        $region21: #{tpu_custom_call.1} parent=19 // pred_check
          %p122 = pneg %p45
        $region22: #{tpu_custom_call.1} parent=19 // pred_check_branch
          %124 = sbr.rel (%p122) target = $region24
        $region23: #{tpu_custom_call.1} parent=19 // pred_region
          %s125 = smul.u32 2, %s19
          %p126 = scmp.lt.s32.totalorder %s18, 1
          %s127 = scalar_select %p126, %s18, 1
          %p128 = scmp.lt.s32.totalorder %s125, 3
          %s129 = scalar_select %p128, %s125, 3
          %s130 = smul.addr %s129, 3
          %s131 = smul.addr %s127, 12
          %s132 = sadd.s32 %s130, %s131
          %s133 = smul.addr %s132, 4
          %s134 = scalar_lea.vmem %s0, %s133
          %s135 = smul.u32 2, %s19
        $region24: #{tpu_custom_call.1} parent=19 // pred_fallthru
          _
      $region20: #{tpu_custom_call.1} parent=5 // pred_fallthru
        _
      %p136 = scmp.le.s32.totalorder 1, %s11
      %p137 = scmp.lt.s32.totalorder %s11, 5
      %p138 = pnand %p136, %p137
      %p139 = pneg %p138
      // Predicated region
      $region25: #{tpu_custom_call.1} parent=5 // pred_check
        _
      $region26: #{tpu_custom_call.1} parent=5 // pred_check_branch
        %141 = sbr.rel (%p138) target = $region28
      $region27: #{tpu_custom_call.1} parent=5 // pred_region
        %s142 = ssub.s32 %s11, 1
        %s143 = smul.u32 2, %s21
        %p144 = scmp.lt.s32.totalorder %s20, 1
        %s145 = scalar_select %p144, %s20, 1
        %p146 = scmp.lt.s32.totalorder %s143, 3
        %s147 = scalar_select %p146, %s143, 3
        %s148 = smul.addr %s147, 3
        %s149 = smul.addr %s145, 12
        %s150 = sadd.s32 %s148, %s149
        %s151 = smul.addr %s150, 4
        %s152 = scalar_lea.vmem %s0, %s151
        %p153 = pneg %p51
        %p154 = pneg %p48
        %p155 = pneg %p72
        %p156 = pneg %p69
        %p157 = pneg %p100
        %p158 = pneg %p97
        %s159 = sand.u32 %s87, 1
        %s160 = scalar_lea.sflag [#allocation3], %s159
        %s161 = sand.u32 %s87, 1
        %s162 = smul.addr %s161, 16
        %s163 = scalar_lea.vmem [#allocation2], %s162
        %s164 = smul.u32 2, %s21
        %p165 = scmp.lt.s32.totalorder %s20, 1
        %s166 = scalar_select %p165, %s20, 1
        %p167 = scmp.lt.s32.totalorder %s164, 3
        %s168 = scalar_select %p167, %s164, 3
        %s169 = smul.addr %s168, 3
        %s170 = smul.addr %s166, 12
        %s171 = sadd.s32 %s169, %s170
        %s172 = smul.addr %s171, 4
        %s173 = scalar_lea.vmem %s0, %s172
        %s174 = smul.u32 2, %s21
        %s175 = smul.u32 2, %s21
        %v177 = vld [vmem:[%s173] sm:$0xff]
        %v178 = vld [vmem:[%s173 + $0x8] sm:$0xf]
        %v179 = vld [vmem:[%s173 + $0xc] sm:$0xff]
        %v180 = vld [vmem:[%s173 + $0x14] sm:$0xf]
        %v181 = vld [vmem:[%s1] sm:$0xff]
        %v182 = vld [vmem:[%s1 + $0x8] sm:$0xff]
        %v183 = vld [vmem:[%s1 + $0x10] sm:$0xff]
        %v184 = vld [vmem:[%s1 + $0x18] sm:$0xff]
        %v185 = vld [vmem:[%s1 + $0x20] sm:$0xff]
        %v186 = vld [vmem:[%s1 + $0x28] sm:$0xff]
        %v187 = vld [vmem:[%s1 + $0x30] sm:$0xff]
        %v188 = vld [vmem:[%s1 + $0x38] sm:$0xff]
        %v189 = vld [vmem:[%s1 + $0x40] sm:$0xff]
        %v190 = vld [vmem:[%s1 + $0x48] sm:$0xff]
        %v191 = vld [vmem:[%s1 + $0x50] sm:$0xff]
        %v192 = vld [vmem:[%s1 + $0x58] sm:$0xff]
        %v193 = vld [vmem:[%s1 + $0x60] sm:$0xff]
        %v194 = vld [vmem:[%s1 + $0x68] sm:$0xff]
        %v195 = vld [vmem:[%s1 + $0x70] sm:$0xff]
        %v196 = vld [vmem:[%s1 + $0x78] sm:$0xff]
        %v197 = vld [vmem:[%s1 + $0x80] sm:$0xff]
        %v198 = vld [vmem:[%s1 + $0x88] sm:$0xff]
        %v199 = vld [vmem:[%s1 + $0x90] sm:$0xff]
        %v200 = vld [vmem:[%s1 + $0x98] sm:$0xff]
        %v201 = vld [vmem:[%s1 + $0xa0] sm:$0xff]
        %v202 = vld [vmem:[%s1 + $0xa8] sm:$0xff]
        %v203 = vld [vmem:[%s1 + $0xb0] sm:$0xff]
        %v204 = vld [vmem:[%s1 + $0xb8] sm:$0xff]
        %v205 = vld [vmem:[%s1 + $0xc0] sm:$0xff]
        %v206 = vld [vmem:[%s1 + $0xc8] sm:$0xff]
        %v207 = vld [vmem:[%s1 + $0xd0] sm:$0xff]
        %v208 = vld [vmem:[%s1 + $0xd8] sm:$0xff]
        %v209 = vld [vmem:[%s1 + $0xe0] sm:$0xff]
        %v210 = vld [vmem:[%s1 + $0xe8] sm:$0xff]
        %v211 = vld [vmem:[%s1 + $0xf0] sm:$0xff]
        %v212 = vld [vmem:[%s1 + $0xf8] sm:$0xff]
        %v213 = vld [vmem:[%s1 + $0x100] sm:$0xff]
        %v214 = vld [vmem:[%s1 + $0x108] sm:$0xff]
        %v215 = vld [vmem:[%s1 + $0x110] sm:$0xff]
        %v216 = vld [vmem:[%s1 + $0x118] sm:$0xff]
        %v217 = vld [vmem:[%s1 + $0x120] sm:$0xff]
        %v218 = vld [vmem:[%s1 + $0x128] sm:$0xff]
        %v219 = vld [vmem:[%s1 + $0x130] sm:$0xff]
        %v220 = vld [vmem:[%s1 + $0x138] sm:$0xff]
        %v221 = vld [vmem:[%s1 + $0x140] sm:$0xff]
        %v222 = vld [vmem:[%s1 + $0x148] sm:$0xff]
        %v223 = vld [vmem:[%s1 + $0x150] sm:$0xff]
        %v224 = vld [vmem:[%s1 + $0x158] sm:$0xff]
        %v225 = vld [vmem:[%s1 + $0x160] sm:$0xff]
        %v226 = vld [vmem:[%s1 + $0x168] sm:$0xff]
        %v227 = vld [vmem:[%s1 + $0x170] sm:$0xff]
        %v228 = vld [vmem:[%s1 + $0x178] sm:$0xff]
        %v233 = vunpack.c.l.b16 %v177
        %v234 = vunpack.c.h.b16 %v177
        %v235 = vunpack.c.l.b16 %v178
        %v236 = vunpack.c.l.b16 %v179
        %v237 = vunpack.c.h.b16 %v179
        %v238 = vunpack.c.l.b16 %v180
        %v239 = vpack.c.b16 %v236, %v233
        %v240 = vpack.c.b16 %v237, %v234
        %v241 = vpack.c.b16 %v238, %v235
        %v293 = vunpack.c.l.b16 %v181
        %v294 = vunpack.c.h.b16 %v181
        %v295 = vunpack.c.l.b16 %v182
        %v296 = vunpack.c.h.b16 %v182
        %v297 = vunpack.c.l.b16 %v183
        %v298 = vunpack.c.h.b16 %v183
        %v299 = vunpack.c.l.b16 %v184
        %v300 = vunpack.c.h.b16 %v184
        %v301 = vunpack.c.l.b16 %v185
        %v302 = vunpack.c.h.b16 %v185
        %v303 = vunpack.c.l.b16 %v186
        %v304 = vunpack.c.h.b16 %v186
        %v305 = vunpack.c.l.b16 %v187
        %v306 = vunpack.c.h.b16 %v187
        %v307 = vunpack.c.l.b16 %v188
        %v308 = vunpack.c.h.b16 %v188
        %v309 = vunpack.c.l.b16 %v189
        %v310 = vunpack.c.h.b16 %v189
        %v311 = vunpack.c.l.b16 %v190
        %v312 = vunpack.c.h.b16 %v190
        %v313 = vunpack.c.l.b16 %v191
        %v314 = vunpack.c.h.b16 %v191
        %v315 = vunpack.c.l.b16 %v192
        %v316 = vunpack.c.h.b16 %v192
        %v317 = vunpack.c.l.b16 %v193
        %v318 = vunpack.c.h.b16 %v193
        %v319 = vunpack.c.l.b16 %v194
        %v320 = vunpack.c.h.b16 %v194
        %v321 = vunpack.c.l.b16 %v195
        %v322 = vunpack.c.h.b16 %v195
        %v323 = vunpack.c.l.b16 %v196
        %v324 = vunpack.c.h.b16 %v196
        %v325 = vunpack.c.l.b16 %v197
        %v326 = vunpack.c.h.b16 %v197
        %v327 = vunpack.c.l.b16 %v198
        %v328 = vunpack.c.h.b16 %v198
        %v329 = vunpack.c.l.b16 %v199
        %v330 = vunpack.c.h.b16 %v199
        %v331 = vunpack.c.l.b16 %v200
        %v332 = vunpack.c.h.b16 %v200
        %v333 = vunpack.c.l.b16 %v201
        %v334 = vunpack.c.h.b16 %v201
        %v335 = vunpack.c.l.b16 %v202
        %v336 = vunpack.c.h.b16 %v202
        %v337 = vunpack.c.l.b16 %v203
        %v338 = vunpack.c.h.b16 %v203
        %v339 = vunpack.c.l.b16 %v204
        %v340 = vunpack.c.h.b16 %v204
        %v341 = vunpack.c.l.b16 %v205
        %v342 = vunpack.c.h.b16 %v205
        %v343 = vunpack.c.l.b16 %v206
        %v344 = vunpack.c.h.b16 %v206
        %v345 = vunpack.c.l.b16 %v207
        %v346 = vunpack.c.h.b16 %v207
        %v347 = vunpack.c.l.b16 %v208
        %v348 = vunpack.c.h.b16 %v208
        %v349 = vunpack.c.l.b16 %v209
        %v350 = vunpack.c.h.b16 %v209
        %v351 = vunpack.c.l.b16 %v210
        %v352 = vunpack.c.h.b16 %v210
        %v353 = vunpack.c.l.b16 %v211
        %v354 = vunpack.c.h.b16 %v211
        %v355 = vunpack.c.l.b16 %v212
        %v356 = vunpack.c.h.b16 %v212
        %v357 = vunpack.c.l.b16 %v213
        %v358 = vunpack.c.h.b16 %v213
        %v359 = vunpack.c.l.b16 %v214
        %v360 = vunpack.c.h.b16 %v214
        %v361 = vunpack.c.l.b16 %v215
        %v362 = vunpack.c.h.b16 %v215
        %v363 = vunpack.c.l.b16 %v216
        %v364 = vunpack.c.h.b16 %v216
        %v365 = vunpack.c.l.b16 %v217
        %v366 = vunpack.c.h.b16 %v217
        %v367 = vunpack.c.l.b16 %v218
        %v368 = vunpack.c.h.b16 %v218
        %v369 = vunpack.c.l.b16 %v219
        %v370 = vunpack.c.h.b16 %v219
        %v371 = vunpack.c.l.b16 %v220
        %v372 = vunpack.c.h.b16 %v220
        %v373 = vunpack.c.l.b16 %v221
        %v374 = vunpack.c.h.b16 %v221
        %v375 = vunpack.c.l.b16 %v222
        %v376 = vunpack.c.h.b16 %v222
        %v377 = vunpack.c.l.b16 %v223
        %v378 = vunpack.c.h.b16 %v223
        %v379 = vunpack.c.l.b16 %v224
        %v380 = vunpack.c.h.b16 %v224
        %v381 = vunpack.c.l.b16 %v225
        %v382 = vunpack.c.h.b16 %v225
        %v383 = vunpack.c.l.b16 %v226
        %v384 = vunpack.c.h.b16 %v226
        %v385 = vunpack.c.l.b16 %v227
        %v386 = vunpack.c.h.b16 %v227
        %v387 = vunpack.c.l.b16 %v228
        %v388 = vunpack.c.h.b16 %v228
        %v389 = vpack.c.b16 %v295, %v293
        %v390 = vpack.c.b16 %v296, %v294
        %v391 = vpack.c.b16 %v299, %v297
        %v392 = vpack.c.b16 %v300, %v298
        %v393 = vpack.c.b16 %v303, %v301
        %v394 = vpack.c.b16 %v304, %v302
        %v395 = vpack.c.b16 %v307, %v305
        %v396 = vpack.c.b16 %v308, %v306
        %v397 = vpack.c.b16 %v311, %v309
        %v398 = vpack.c.b16 %v312, %v310
        %v399 = vpack.c.b16 %v315, %v313
        %v400 = vpack.c.b16 %v316, %v314
        %v401 = vpack.c.b16 %v319, %v317
        %v402 = vpack.c.b16 %v320, %v318
        %v403 = vpack.c.b16 %v323, %v321
        %v404 = vpack.c.b16 %v324, %v322
        %v405 = vpack.c.b16 %v327, %v325
        %v406 = vpack.c.b16 %v328, %v326
        %v407 = vpack.c.b16 %v331, %v329
        %v408 = vpack.c.b16 %v332, %v330
        %v409 = vpack.c.b16 %v335, %v333
        %v410 = vpack.c.b16 %v336, %v334
        %v411 = vpack.c.b16 %v339, %v337
        %v412 = vpack.c.b16 %v340, %v338
        %v413 = vpack.c.b16 %v343, %v341
        %v414 = vpack.c.b16 %v344, %v342
        %v415 = vpack.c.b16 %v347, %v345
        %v416 = vpack.c.b16 %v348, %v346
        %v417 = vpack.c.b16 %v351, %v349
        %v418 = vpack.c.b16 %v352, %v350
        %v419 = vpack.c.b16 %v355, %v353
        %v420 = vpack.c.b16 %v356, %v354
        %v421 = vpack.c.b16 %v359, %v357
        %v422 = vpack.c.b16 %v360, %v358
        %v423 = vpack.c.b16 %v363, %v361
        %v424 = vpack.c.b16 %v364, %v362
        %v425 = vpack.c.b16 %v367, %v365
        %v426 = vpack.c.b16 %v368, %v366
        %v427 = vpack.c.b16 %v371, %v369
        %v428 = vpack.c.b16 %v372, %v370
        %v429 = vpack.c.b16 %v375, %v373
        %v430 = vpack.c.b16 %v376, %v374
        %v431 = vpack.c.b16 %v379, %v377
        %v432 = vpack.c.b16 %v380, %v378
        %v433 = vpack.c.b16 %v383, %v381
        %v434 = vpack.c.b16 %v384, %v382
        %v435 = vpack.c.b16 %v387, %v385
        %v436 = vpack.c.b16 %v388, %v386
        %485 = vmatprep.subr.bf16.mxu0 %v390
        %486 = vmatpush1.bf16.msra.mxu0 %v389
        %487 = vmatprep.subr.bf16.mxu0 %v392
        %488 = vmatpush1.bf16.msra.mxu0 %v391
        %489 = vmatprep.subr.bf16.mxu0 %v394
        %490 = vmatpush1.bf16.msra.mxu0 %v393
        %491 = vmatprep.subr.bf16.mxu0 %v396
        %492 = vmatpush1.bf16.msra.mxu0 %v395
        %493 = vmatprep.subr.bf16.mxu0 %v398
        %494 = vmatpush1.bf16.msra.mxu0 %v397
        %495 = vmatprep.subr.bf16.mxu0 %v400
        %496 = vmatpush1.bf16.msra.mxu0 %v399
        %497 = vmatprep.subr.bf16.mxu0 %v402
        %498 = vmatpush1.bf16.msra.mxu0 %v401
        %499 = vmatprep.subr.bf16.mxu0 %v404
        %500 = vmatpush1.bf16.msra.mxu0 %v403
        %501 = vmatprep.subr.bf16.mxu0 %v406
        %502 = vmatpush1.bf16.msra.mxu0 %v405
        %503 = vmatprep.subr.bf16.mxu0 %v408
        %504 = vmatpush1.bf16.msra.mxu0 %v407
        %505 = vmatprep.subr.bf16.mxu0 %v410
        %506 = vmatpush1.bf16.msra.mxu0 %v409
        %507 = vmatprep.subr.bf16.mxu0 %v412
        %508 = vmatpush1.bf16.msra.mxu0 %v411
        %509 = vmatprep.subr.bf16.mxu0 %v414
        %510 = vmatpush1.bf16.msra.mxu0 %v413
        %511 = vmatprep.subr.bf16.mxu0 %v416
        %512 = vmatpush1.bf16.msra.mxu0 %v415
        %513 = vmatprep.subr.bf16.mxu0 %v418
        %514 = vmatpush1.bf16.msra.mxu0 %v417
        %515 = vmatprep.subr.bf16.mxu0 %v420
        %516 = vmatpush1.bf16.msra.mxu0 %v419
        %517 = vmatprep.mubr.bf16.mxu0 %v240
        %518 = vmatmul.mubr.bf16.gmra.mrb[0].mxu0 %v239
        %v519 = vpop.f32.mrb[0].mxu0
        %v520 = vadd.f32 0.0, %v519
        %v521 = vpop.f32.mrb[0].mxu0
        %v522 = vadd.f32 0.0, %v521
        %v523 = vpop.f32.mrb[0].mxu0
        %v524 = vadd.f32 0.0, %v523
        %v525 = vpop.f32.mrb[0].mxu0
        %v526 = vadd.f32 0.0, %v525
        %527 = vdwg.mxu0
        %528 = vmatprep.subr.bf16.mxu0 %v422
        %529 = vmatpush1.bf16.msra.mxu0 %v421
        %530 = vmatprep.subr.bf16.mxu0 %v424
        %531 = vmatpush1.bf16.msra.mxu0 %v423
        %532 = vmatprep.subr.bf16.mxu0 %v426
        %533 = vmatpush1.bf16.msra.mxu0 %v425
        %534 = vmatprep.subr.bf16.mxu0 %v428
        %535 = vmatpush1.bf16.msra.mxu0 %v427
        %536 = vmatprep.subr.bf16.mxu0 %v430
        %537 = vmatpush1.bf16.msra.mxu0 %v429
        %538 = vmatprep.subr.bf16.mxu0 %v432
        %539 = vmatpush1.bf16.msra.mxu0 %v431
        %540 = vmatprep.subr.bf16.mxu0 %v434
        %541 = vmatpush1.bf16.msra.mxu0 %v433
        %542 = vmatprep.subr.bf16.mxu0 %v436
        %543 = vmatpush1.bf16.msra.mxu0 %v435
        %544 = vmatprep.subr.bf16.mxu0 0
        %545 = vmatpush1.bf16.msra.mxu0 0
        %546 = vmatprep.subr.bf16.mxu0 0
        %547 = vmatpush1.bf16.msra.mxu0 0
        %548 = vmatprep.subr.bf16.mxu0 0
        %549 = vmatpush1.bf16.msra.mxu0 0
        %550 = vmatprep.subr.bf16.mxu0 0
        %551 = vmatpush1.bf16.msra.mxu0 0
        %552 = vmatprep.subr.bf16.mxu0 0
        %553 = vmatpush1.bf16.msra.mxu0 0
        %554 = vmatprep.subr.bf16.mxu0 0
        %555 = vmatpush1.bf16.msra.mxu0 0
        %556 = vmatprep.subr.bf16.mxu0 0
        %557 = vmatpush1.bf16.msra.mxu0 0
        %558 = vmatprep.subr.bf16.mxu0 0
        %559 = vmatpush1.bf16.msra.mxu0 0
        %560 = vmatprep.mubr.bf16.mxu0 0
        %561 = vmatmul.mubr.bf16.gmra.mrb[0].mxu0 %v241
        %v562 = vpop.f32.mrb[0].mxu0
        %v563 = vadd.f32 %v520, %v562
        %v564 = vpop.f32.mrb[0].mxu0
        %v565 = vadd.f32 %v522, %v564
        %v566 = vpop.f32.mrb[0].mxu0
        %v567 = vadd.f32 %v524, %v566
        %v568 = vpop.f32.mrb[0].mxu0
        %v569 = vadd.f32 %v526, %v568
        %570 = vdwg.mxu0
        %v571 = vpack.c.bf16 %v567, %v563
        %v572 = vpack.c.bf16 %v569, %v565
        %v575 = vunpack.c.l.b16 %v571
        %v576 = vunpack.c.l.b16 %v572
        %v577 = vunpack.c.h.b16 %v571
        %v578 = vunpack.c.h.b16 %v572
        %v579 = vpack.c.b16 %v576, %v575
        %v580 = vpack.c.b16 %v578, %v577
        %vm583 = vcmask 1043456
        %vm584 = vcmask 523268
        %vm585 = vmor %vm584, %vm583
        %586 = vst.msk [vmem:[%s163] sm:$0xff] %vm585, %v579
        %587 = vst.msk [vmem:[%s163 + $0x8] sm:$0xff] %vm585, %v580
        %s588 = sand.u32 %s87, 1
        %s589 = scalar_lea.sflag [#allocation3], %s588
        %s590 = sand.u32 %s87, 1
        %s591 = smul.addr %s590, 16
        %s592 = scalar_lea.vmem [#allocation2], %s591
        // Predicated region
        $region29: #{tpu_custom_call.1} parent=27 // pred_check
          %p593 = pneg %p97
        $region30: #{tpu_custom_call.1} parent=27 // pred_check_branch
          %595 = sbr.rel (%p593) target = $region32
        $region31: #{tpu_custom_call.1} parent=27 // pred_region
          %s596 = smul.u32 2, %s21
          %s598 = ssub.s32 256, 256
          %599 = vsyncadd %s589, %s598
          %s600 = smul.addr %s596, 2
          %s601 = smul.addr %s20, 8
          %s602 = sadd.s32 %s600, %s601
          %s603 = smul.addr %s602, 64
          %s604 = scalar_lea.hbm %s2, %s603
          %s605 = sshll.u32 %s592, 4
          %s606 = int_to_ptr.vmem [resolvable:$true] %s605
          %611 = dma.vmem_to_hbm [thread:$0]  %s606, 256, %s604, %s589, 128, 128, 8
        $region32: #{tpu_custom_call.1} parent=27 // pred_fallthru
          _
      $region28: #{tpu_custom_call.1} parent=5 // pred_fallthru
        _
      %p612 = scmp.le.s32.totalorder 2, %s11
      // Predicated region
      $region33: #{tpu_custom_call.1} parent=5 // pred_check
        %p613 = pneg %p612
      $region34: #{tpu_custom_call.1} parent=5 // pred_check_branch
        %615 = sbr.rel (%p613) target = $region36
      $region35: #{tpu_custom_call.1} parent=5 // pred_region
        %s616 = ssub.s32 %s11, 2
        // Predicated region
        $region37: #{tpu_custom_call.1} parent=35 // pred_check
          %p617 = pneg %p103
        $region38: #{tpu_custom_call.1} parent=35 // pred_check_branch
          %619 = sbr.rel (%p617) target = $region40
        $region39: #{tpu_custom_call.1} parent=35 // pred_region
          %s620 = sand.u32 %s88, 1
          %s621 = scalar_lea.sflag [#allocation3], %s620
          %s622 = sand.u32 %s88, 1
          %s623 = smul.addr %s622, 16
          %s624 = scalar_lea.vmem [#allocation2], %s623
          %625 = dma.done %s621, 256
        $region40: #{tpu_custom_call.1} parent=35 // pred_fallthru
          _
      $region36: #{tpu_custom_call.1} parent=5 // pred_fallthru
        _
    $region6: #{tpu_custom_call.1} parent=1 // loop_footer
      %s15 = sadd.s32 1, %s11
    $region7: #{tpu_custom_call.1} parent=1 // loop_footer_branch
      %10 = sbr.rel target = $region3
    $region8: #{tpu_custom_call.1} parent=1 // loop_exit
      _
    %626 = vsyncpa [#allocation3], 1
    %s627 = scalar_lea.sflag [#allocation3], 1
    %628 = vsyncpa %s627, 1

</llo_original>
